<compile_context>
chip_gen: v7x
topology: tpu7x:2x2x1
jax: 0.10.0
libtpu: 0.0.40
codegen_flags: <defaults>
</compile_context>

<pallas_src>
import functools

import jax
import jax.numpy as jnp
from jax import lax
from jax.experimental import pallas as pl
from jax.experimental.pallas import tpu as pltpu


_SQRT_HALF = 0.7071067811865476
_MIB = 1024 * 1024


def _gelu(x, approx=False):
    if approx:
        # tanh-approx GELU -> EUP transcendental slot (use for bf16 models
        # where the exact-erf f32 VALU chain can become the binding unit).
        return jax.nn.gelu(x, approximate=True)
    # Exact erf GELU == PyTorch nn.GELU() default.
    return 0.5 * x * (1.0 + lax.erf(x * _SQRT_HALF))


def _mlp_kernel(x_ref, w1_ref, b1_ref, w2_ref, b2_ref, o_ref, *scratch,
                approx_gelu):
    # Grid: (row tiles [parallel], out-col tiles [parallel], hidden [reduction]).
    # x_ref : (rt, dim)      w1_ref: (dim, th)   b1_ref: (1, th)
    # w2_ref: (th, tn)       b2_ref: (1, tn)     o_ref : (rt, tn)
    # scratch: optional (rt, tn) f32 accumulator (omitted for f32 outputs,
    # where the hidden-axis-resident output block itself is the accumulator).
    acc_ref = scratch[0] if scratch else o_ref
    k = pl.program_id(2)

    @pl.when(k == 0)
    def _():
        acc_ref[...] = jnp.zeros_like(acc_ref)

    h = jnp.dot(x_ref[...], w1_ref[...], preferred_element_type=jnp.float32)
    h = h + b1_ref[...].astype(jnp.float32)
    h = _gelu(h, approx_gelu)
    # Dropout(p=0.0) / eval mode is the identity.
    # TODO(synk): training-mode dropout (p > 0) would need pltpu.prng_* masking.
    acc_ref[...] += jnp.dot(h.astype(w2_ref.dtype), w2_ref[...],
                            preferred_element_type=jnp.float32
                            ).astype(acc_ref.dtype)

    @pl.when(k == pl.num_programs(2) - 1)
    def _():
        o_ref[...] = (acc_ref[...].astype(jnp.float32)
                      + b2_ref[...].astype(jnp.float32)).astype(o_ref.dtype)


def _round_up(x, m):
    return ((x + m - 1) // m) * m


def _vmem_capacity_bytes():
    try:
        return int(pltpu.get_tpu_info().vmem_capacity_bytes)
    except Exception:
        return 64 * _MIB          # conservative default (v7x per-TC VMEM)


def _has_two_tensorcores():
    # v4 / v5p / v7x expose two TensorCores per chip ("megacore"); v5e / v6e
    # have a single TC where splitting the parallel axis only adds overhead.
    try:
        kind = jax.devices()[0].device_kind.lower()
    except Exception:
        return False
    return any(tag in kind for tag in ("v7", "v4", "v5p"))


def _choose_tiles(rows, dim, hidden, dim_out, in_itemsize, out_itemsize,
                  acc_in_out, sublane, budget_bytes, two_tc):
    """Pick (row_tile, hidden_tile, out_tile) under a VMEM budget.

    Preference: (1) fully resident weights (constant block index -> weights
    stream from HBM once), (2) resident w1, (3) anything else; within a
    class, the largest row tile (MXU M), then the largest weight tiles.
    """
    rt_cap = max(_round_up(rows, sublane), sublane)
    rt_cands = [t for t in (2048, 1024, 512, 256, 128, 64, 32, 16, 8)
                if t % sublane == 0 and t <= rt_cap]
    if not rt_cands:
        rt_cands = [rt_cap]

    th_cands = [hidden] + [t for t in (4096, 2048, 1024, 512, 256, 128)
                           if t < hidden and hidden % t == 0]
    tn_cands = [dim_out] + [t for t in (4096, 2048, 1024, 512, 256, 128)
                            if t < dim_out and dim_out % t == 0]

    def vmem_est(rt, th, tn):
        # Conservative: 2 pipeline buffers per block (the single-buffer
        # request for constant-index weights only lowers real usage).
        est = 2 * rt * dim * in_itemsize            # x tile
        est += 2 * dim * th * in_itemsize           # w1 tile
        est += 2 * th * in_itemsize                 # b1 tile
        est += 2 * th * tn * in_itemsize            # w2 tile
        est += 2 * tn * in_itemsize                 # b2 tile
        est += 2 * rt * tn * out_itemsize           # out tile
        if not acc_in_out:
            est += rt * tn * 4                      # f32 accumulator scratch
        return est

    weight_cands = []
    for th in th_cands:
        for tn in tn_cands:
            cls = 0 if (th == hidden and tn == dim_out) else \
                  (1 if th == hidden else 2)
            weight_cands.append((cls, th, tn))
    weight_cands.sort(key=lambda c: (c[0], -c[1], -c[2]))

    rt_floor = min(256, rt_cands[0])   # keep the MXU M dimension healthy
    chosen = None
    for require_big_rt in (True, False):
        for _, th, tn in weight_cands:
            for rt in rt_cands:        # descending: largest fitting row tile
                if require_big_rt and rt < rt_floor:
                    continue
                if vmem_est(rt, th, tn) <= budget_bytes:
                    chosen = (rt, th, tn)
                    break
            if chosen is not None:
                break
        if chosen is not None:
            break
    if chosen is None:
        # Pathological shapes: smallest tiles, let vmem_limit_bytes arbitrate.
        chosen = (rt_cands[-1], th_cands[-1], tn_cands[-1])
    rt, th, tn = chosen

    # 2-TC chips shard the parallel grid axes across cores: prefer an even
    # number of parallel tiles so neither core idles.  1-TC chips: no split.
    if two_tc:
        def n_parallel(rt_):
            return pl.cdiv(rows, rt_) * pl.cdiv(dim_out, tn)
        if n_parallel(rt) % 2 != 0:
            for rt2 in rt_cands:
                if (rt2 < rt and n_parallel(rt2) % 2 == 0
                        and vmem_est(rt2, th, tn) <= budget_bytes):
                    rt = rt2
                    break
    return rt, th, tn


def mlp_pallas(x, w1, b1, w2, b2, *, approx_gelu=False):
    """x: [..., dim] -> [..., dim_out]; all compute inside one Pallas kernel."""
    dim = x.shape[-1]
    hidden = w1.shape[1]
    dim_out = w2.shape[1]
    lead = x.shape[:-1]
    rows = 1
    for s in lead:
        rows *= s
    x2d = x.reshape(rows, dim)
    b1_2d = b1.reshape(1, hidden)
    b2_2d = b2.reshape(1, dim_out)

    out_dtype = x.dtype
    in_itemsize = max(jnp.dtype(x.dtype).itemsize, jnp.dtype(w1.dtype).itemsize)
    out_itemsize = jnp.dtype(out_dtype).itemsize
    sublane = 8 if in_itemsize >= 4 else (16 if in_itemsize == 2 else 32)

    # f32 outputs accumulate directly into the resident output block.
    acc_in_out = jnp.dtype(out_dtype) == jnp.dtype(jnp.float32)

    # Generation-aware VMEM budget (128 MiB on v5e/v6e, 64 MiB per-TC on v7x).
    vmem_cap = _vmem_capacity_bytes()
    if vmem_cap >= 128 * _MIB:
        budget_bytes, vmem_limit = 96 * _MIB, 110 * _MIB
    elif vmem_cap >= 64 * _MIB:
        budget_bytes, vmem_limit = 36 * _MIB, 48 * _MIB
    else:
        vmem_limit = max(int(vmem_cap * 0.75), 16 * _MIB)
        budget_bytes = max(int(vmem_cap * 0.55), 12 * _MIB)

    two_tc = _has_two_tensorcores()
    rt, th, tn = _choose_tiles(rows, dim, hidden, dim_out, in_itemsize,
                               out_itemsize, acc_in_out, sublane,
                               budget_bytes, two_tc)

    gi = pl.cdiv(rows, rt)
    gj = pl.cdiv(dim_out, tn)      # tn == dim_out or an exact divisor
    gk = hidden // th              # th == hidden or an exact divisor
    grid = (gi, gj, gk)

    # Honest cost estimate: constant-index weight blocks are streamed once.
    x_bytes = rows * dim * in_itemsize
    o_bytes = rows * dim_out * out_itemsize
    w1_bytes = dim * hidden * in_itemsize * (1 if gk == 1 else gi * gj)
    w2_bytes = hidden * dim_out * in_itemsize * (1 if (gk == 1 and gj == 1) else gi)
    b_bytes = (hidden + dim_out) * in_itemsize
    flops = 2 * rows * dim * hidden * gj + 2 * rows * hidden * dim_out
    cost = pl.CostEstimate(
        flops=int(flops),
        transcendentals=int(rows * hidden * gj) if approx_gelu else 0,
        bytes_accessed=int(x_bytes + o_bytes + w1_bytes + w2_bytes + b_bytes))

    kernel = functools.partial(_mlp_kernel, approx_gelu=approx_gelu)
    scratch_shapes = [] if acc_in_out else [pltpu.VMEM((rt, tn), jnp.float32)]

    def _spec(shape, index_map, constant, single_buffer):
        if constant and single_buffer:
            # Constant block index -> second pipeline buffer is dead weight.
            return pl.BlockSpec(shape, index_map, pipeline_mode=pl.Buffered(1))
        return pl.BlockSpec(shape, index_map)

    def _run(single_buffer):
        in_specs = [
            pl.BlockSpec((rt, dim), lambda i, j, k: (i, 0)),
            _spec((dim, th), lambda i, j, k: (0, k), gk == 1, single_buffer),
            _spec((1, th), lambda i, j, k: (0, k), gk == 1, single_buffer),
            _spec((th, tn), lambda i, j, k: (k, j), gk == 1 and gj == 1,
                  single_buffer),
            _spec((1, tn), lambda i, j, k: (0, j), gj == 1, single_buffer),
        ]
        return pl.pallas_call(
            kernel,
            out_shape=jax.ShapeDtypeStruct((rows, dim_out), out_dtype),
            grid_spec=pltpu.PrefetchScalarGridSpec(
                num_scalar_prefetch=0,
                grid=grid,
                in_specs=in_specs,
                out_specs=pl.BlockSpec((rt, tn), lambda i, j, k: (i, j)),
                scratch_shapes=scratch_shapes,
            ),
            compiler_params=pltpu.CompilerParams(
                dimension_semantics=("parallel", "parallel", "arbitrary"),
                vmem_limit_bytes=int(vmem_limit),
            ),
            cost_estimate=cost,
        )(x2d, w1, b1_2d, w2, b2_2d)

    want_single_buffer = hasattr(pl, "Buffered") and (gk == 1 or gj == 1)
    if want_single_buffer:
        try:
            out2d = _run(True)
        except Exception:
            # pipeline_mode=Buffered(1) unsupported here -> default buffering
            # (the VMEM budget already assumed double buffering, so this fits).
            out2d = _run(False)
    else:
        out2d = _run(False)

    return out2d.reshape(*lead, dim_out)


def init_mlp_params(key, dim, dim_out, mult=4, dtype=jnp.float32):
    """Deterministic init mimicking nn.Linear (uniform +/- 1/sqrt(fan_in))."""
    hidden = int(dim * mult)
    k1, k2, k3, k4 = jax.random.split(key, 4)
    lim1 = 1.0 / (dim ** 0.5)
    lim2 = 1.0 / (hidden ** 0.5)
    # Stored [in, out] (transpose of PyTorch's [out, in]) so the kernel does x @ W.
    w1 = jax.random.uniform(k1, (dim, hidden), dtype, -lim1, lim1)
    b1 = jax.random.uniform(k2, (hidden,), dtype, -lim1, lim1)
    w2 = jax.random.uniform(k3, (hidden, dim_out), dtype, -lim2, lim2)
    b2 = jax.random.uniform(k4, (dim_out,), dtype, -lim2, lim2)
    return w1, b1, w2, b2


if __name__ == "__main__":
    key = jax.random.PRNGKey(0)
    kx, kp, kx2, kp2 = jax.random.split(key, 4)

    # Primary check: batch=2, seq=8, dim=32, dim_out=32, mult=4 (hidden=128).
    batch, seq, dim, dim_out, mult = 2, 8, 32, 32, 4
    x = jax.random.normal(kx, (batch, seq, dim), jnp.float32)
    w1, b1, w2, b2 = init_mlp_params(kp, dim, dim_out, mult)

    out = jax.block_until_ready(mlp_pallas(x, w1, b1, w2, b2))
    ref = _gelu(x @ w1 + b1) @ w2 + b2
    assert out.shape == (batch, seq, dim_out)
    assert jnp.allclose(out, ref, atol=5e-5, rtol=5e-5)

    # Ragged check: rows not a multiple of the row tile and a non-128-multiple
    # dim_out (exercises clipped final row block and masked lane stores).
    batch2, seq2, dim2, dim_out2 = 2, 7, 32, 48
    x2 = jax.random.normal(kx2, (batch2, seq2, dim2), jnp.float32)
    p2 = init_mlp_params(kp2, dim2, dim_out2, mult)
    out2 = jax.block_until_ready(mlp_pallas(x2, *p2))
    ref2 = _gelu(x2 @ p2[0] + p2[1]) @ p2[2] + p2[3]
    assert out2.shape == (batch2, seq2, dim_out2)
    assert jnp.allclose(out2, ref2, atol=5e-5, rtol=5e-5)

    print("KERNEL_OK")
</pallas_src>

<mosaic_0001>
module attributes {stable_mosaic.version = 11 : i64} {
  func.func @_mlp_kernel(%arg0: i32, %arg1: i32, %arg2: i32, %arg3: memref<16x32xf32, #tpu.memory_space<vmem>>, %arg4: memref<32x128xf32, #tpu.memory_space<vmem>>, %arg5: memref<1x128xf32, #tpu.memory_space<vmem>>, %arg6: memref<128x32xf32, #tpu.memory_space<vmem>>, %arg7: memref<1x32xf32, #tpu.memory_space<vmem>>, %arg8: memref<16x32xf32, #tpu.memory_space<vmem>>) attributes {dimension_semantics = [#tpu.dimension_semantics<parallel>, #tpu.dimension_semantics<parallel>, #tpu.dimension_semantics<arbitrary>], iteration_bounds = array<i64: 1, 1, 1>, scalar_prefetch = 0 : i64, scratch_operands = 0 : i64, tpu.core_type = #tpu.core_type<tc>, window_params = [{transform_indices = @transform_0, window_bounds = array<i64: 16, 32>}, {pipeline_mode = #tpu.pipeline_mode<synchronous>, transform_indices = @transform_1, window_bounds = array<i64: 32, 128>}, {pipeline_mode = #tpu.pipeline_mode<synchronous>, transform_indices = @transform_2, window_bounds = array<i64: 1, 128>}, {pipeline_mode = #tpu.pipeline_mode<synchronous>, transform_indices = @transform_3, window_bounds = array<i64: 128, 32>}, {pipeline_mode = #tpu.pipeline_mode<synchronous>, transform_indices = @transform_4, window_bounds = array<i64: 1, 32>}, {transform_indices = @transform_5, window_bounds = array<i64: 16, 32>}]} {
    %c0_i32 = arith.constant 0 : i32
    %0 = arith.cmpi eq, %arg2, %c0_i32 : i32
    %1 = arith.extui %0 : i1 to i32
    %c0_i32_0 = arith.constant 0 : i32
    %2 = arith.cmpi ne, %1, %c0_i32_0 : i32
    scf.if %2 {
      %cst_18 = arith.constant 0.000000e+00 : f32
      %25 = vector.broadcast %cst_18 : f32 to vector<16x32xf32>
      %c0_19 = arith.constant 0 : index
      %c0_20 = arith.constant 0 : index
      %26 = vector.load %arg8[%c0_19, %c0_20] : memref<16x32xf32, #tpu.memory_space<vmem>>, vector<16x32xf32>
      tpu.vector_store %arg8[%c0_19, %c0_20], %25 {strides = array<i32>} : memref<16x32xf32, #tpu.memory_space<vmem>>, vector<16x32xf32>,
    } else {
    }
    %c0 = arith.constant 0 : index
    %c0_1 = arith.constant 0 : index
    %3 = vector.load %arg3[%c0, %c0_1] : memref<16x32xf32, #tpu.memory_space<vmem>>, vector<16x32xf32>
    %c0_2 = arith.constant 0 : index
    %c0_3 = arith.constant 0 : index
    %4 = vector.load %arg4[%c0_2, %c0_3] : memref<32x128xf32, #tpu.memory_space<vmem>>, vector<32x128xf32>
    %cst = arith.constant dense<0.000000e+00> : vector<16x128xf32>
    %5 = tpu.matmul %3, %4, %cst {dimension_numbers = #tpu.dot_dimension_numbers<[1], [0], [0], [1], [0, 0, 1, 1], [], []>} : vector<16x32xf32>, vector<32x128xf32>, vector<16x128xf32> -> vector<16x128xf32>
    %c0_4 = arith.constant 0 : index
    %c0_5 = arith.constant 0 : index
    %6 = vector.load %arg5[%c0_4, %c0_5] : memref<1x128xf32, #tpu.memory_space<vmem>>, vector<1x128xf32>
    %7 = vector.broadcast %6 : vector<1x128xf32> to vector<16x128xf32>
    %8 = arith.addf %5, %7 : vector<16x128xf32>
    %cst_6 = arith.constant 5.000000e-01 : f32
    %9 = vector.broadcast %cst_6 : f32 to vector<16x128xf32>
    %10 = arith.mulf %9, %8 : vector<16x128xf32>
    %cst_7 = arith.constant 0.707106769 : f32
    %11 = vector.broadcast %cst_7 : f32 to vector<16x128xf32>
    %12 = arith.mulf %8, %11 : vector<16x128xf32>
    %13 = math.erf %12 : vector<16x128xf32>
    %cst_8 = arith.constant 1.000000e+00 : f32
    %14 = vector.broadcast %cst_8 : f32 to vector<16x128xf32>
    %15 = arith.addf %14, %13 : vector<16x128xf32>
    %16 = arith.mulf %10, %15 : vector<16x128xf32>
    %c0_9 = arith.constant 0 : index
    %c0_10 = arith.constant 0 : index
    %17 = vector.load %arg8[%c0_9, %c0_10] : memref<16x32xf32, #tpu.memory_space<vmem>>, vector<16x32xf32>
    %c0_11 = arith.constant 0 : index
    %c0_12 = arith.constant 0 : index
    %18 = vector.load %arg6[%c0_11, %c0_12] : memref<128x32xf32, #tpu.memory_space<vmem>>, vector<128x32xf32>
    %cst_13 = arith.constant dense<0.000000e+00> : vector<16x32xf32>
    %19 = tpu.matmul %16, %18, %cst_13 {dimension_numbers = #tpu.dot_dimension_numbers<[1], [0], [0], [1], [0, 0, 1, 1], [], []>} : vector<16x128xf32>, vector<128x32xf32>, vector<16x32xf32> -> vector<16x32xf32>
    %20 = arith.addf %17, %19 : vector<16x32xf32>
    %c0_14 = arith.constant 0 : index
    %c0_15 = arith.constant 0 : index
    %21 = vector.load %arg8[%c0_14, %c0_15] : memref<16x32xf32, #tpu.memory_space<vmem>>, vector<16x32xf32>
    tpu.vector_store %arg8[%c0_14, %c0_15], %20 {strides = array<i32>} : memref<16x32xf32, #tpu.memory_space<vmem>>, vector<16x32xf32>,
    %c0_i32_16 = arith.constant 0 : i32
    %22 = arith.cmpi eq, %arg2, %c0_i32_16 : i32
    %23 = arith.extui %22 : i1 to i32
    %c0_i32_17 = arith.constant 0 : i32
    %24 = arith.cmpi ne, %23, %c0_i32_17 : i32
    scf.if %24 {
      %c0_18 = arith.constant 0 : index
      %c0_19 = arith.constant 0 : index
      %25 = vector.load %arg8[%c0_18, %c0_19] : memref<16x32xf32, #tpu.memory_space<vmem>>, vector<16x32xf32>
      %c0_20 = arith.constant 0 : index
      %c0_21 = arith.constant 0 : index
      %26 = vector.load %arg7[%c0_20, %c0_21] : memref<1x32xf32, #tpu.memory_space<vmem>>, vector<1x32xf32>
      %27 = vector.broadcast %26 : vector<1x32xf32> to vector<16x32xf32>
      %28 = arith.addf %25, %27 : vector<16x32xf32>
      %c0_22 = arith.constant 0 : index
      %c0_23 = arith.constant 0 : index
      %29 = vector.load %arg8[%c0_22, %c0_23] : memref<16x32xf32, #tpu.memory_space<vmem>>, vector<16x32xf32>
      tpu.vector_store %arg8[%c0_22, %c0_23], %28 {strides = array<i32>} : memref<16x32xf32, #tpu.memory_space<vmem>>, vector<16x32xf32>,
    } else {
    }
    return
  }
  func.func @transform_0(%arg0: i32, %arg1: i32, %arg2: i32) -> (i32, i32) {
    %c0_i32 = arith.constant 0 : i32
    %c0_i32_0 = arith.constant 0 : i32
    return %arg0, %c0_i32 : i32, i32
  }
  func.func @transform_1(%arg0: i32, %arg1: i32, %arg2: i32) -> (i32, i32) {
    %c0_i32 = arith.constant 0 : i32
    %c0_i32_0 = arith.constant 0 : i32
    return %c0_i32, %arg2 : i32, i32
  }
  func.func @transform_2(%arg0: i32, %arg1: i32, %arg2: i32) -> (i32, i32) {
    %c0_i32 = arith.constant 0 : i32
    %c0_i32_0 = arith.constant 0 : i32
    return %c0_i32, %arg2 : i32, i32
  }
  func.func @transform_3(%arg0: i32, %arg1: i32, %arg2: i32) -> (i32, i32) {
    %c0_i32 = arith.constant 0 : i32
    return %arg2, %arg1 : i32, i32
  }
  func.func @transform_4(%arg0: i32, %arg1: i32, %arg2: i32) -> (i32, i32) {
    %c0_i32 = arith.constant 0 : i32
    %c0_i32_0 = arith.constant 0 : i32
    return %c0_i32, %arg1 : i32, i32
  }
  func.func @transform_5(%arg0: i32, %arg1: i32, %arg2: i32) -> (i32, i32) {
    %c0_i32 = arith.constant 0 : i32
    return %arg0, %arg1 : i32, i32
  }
}

module attributes {stable_mosaic.version = 11 : i64} {
  func.func @_mlp_kernel(%arg0: i32, %arg1: i32, %arg2: i32, %arg3: memref<16x32xf32, #tpu.memory_space<vmem>>, %arg4: memref<32x128xf32, #tpu.memory_space<vmem>>, %arg5: memref<1x128xf32, #tpu.memory_space<vmem>>, %arg6: memref<128x32xf32, #tpu.memory_space<vmem>>, %arg7: memref<1x32xf32, #tpu.memory_space<vmem>>, %arg8: memref<16x32xf32, #tpu.memory_space<vmem>>) attributes {dimension_semantics = [#tpu.dimension_semantics<parallel>, #tpu.dimension_semantics<parallel>, #tpu.dimension_semantics<arbitrary>], iteration_bounds = array<i64: 1, 1, 1>, scalar_prefetch = 0 : i64, scratch_operands = 0 : i64, tpu.core_type = #tpu.core_type<tc>, window_params = [{transform_indices = @transform_0, window_bounds = array<i64: 16, 32>}, {transform_indices = @transform_1, window_bounds = array<i64: 32, 128>}, {transform_indices = @transform_2, window_bounds = array<i64: 1, 128>}, {transform_indices = @transform_3, window_bounds = array<i64: 128, 32>}, {transform_indices = @transform_4, window_bounds = array<i64: 1, 32>}, {transform_indices = @transform_5, window_bounds = array<i64: 16, 32>}]} {
    %c0_i32 = arith.constant 0 : i32
    %0 = arith.cmpi eq, %arg2, %c0_i32 : i32
    %1 = arith.extui %0 : i1 to i32
    %c0_i32_0 = arith.constant 0 : i32
    %2 = arith.cmpi ne, %1, %c0_i32_0 : i32
    scf.if %2 {
      %cst_18 = arith.constant 0.000000e+00 : f32
      %25 = vector.broadcast %cst_18 : f32 to vector<16x32xf32>
      %c0_19 = arith.constant 0 : index
      %c0_20 = arith.constant 0 : index
      %26 = vector.load %arg8[%c0_19, %c0_20] : memref<16x32xf32, #tpu.memory_space<vmem>>, vector<16x32xf32>
      tpu.vector_store %arg8[%c0_19, %c0_20], %25 {strides = array<i32>} : memref<16x32xf32, #tpu.memory_space<vmem>>, vector<16x32xf32>,
    } else {
    }
    %c0 = arith.constant 0 : index
    %c0_1 = arith.constant 0 : index
    %3 = vector.load %arg3[%c0, %c0_1] : memref<16x32xf32, #tpu.memory_space<vmem>>, vector<16x32xf32>
    %c0_2 = arith.constant 0 : index
    %c0_3 = arith.constant 0 : index
    %4 = vector.load %arg4[%c0_2, %c0_3] : memref<32x128xf32, #tpu.memory_space<vmem>>, vector<32x128xf32>
    %cst = arith.constant dense<0.000000e+00> : vector<16x128xf32>
    %5 = tpu.matmul %3, %4, %cst {dimension_numbers = #tpu.dot_dimension_numbers<[1], [0], [0], [1], [0, 0, 1, 1], [], []>} : vector<16x32xf32>, vector<32x128xf32>, vector<16x128xf32> -> vector<16x128xf32>
    %c0_4 = arith.constant 0 : index
    %c0_5 = arith.constant 0 : index
    %6 = vector.load %arg5[%c0_4, %c0_5] : memref<1x128xf32, #tpu.memory_space<vmem>>, vector<1x128xf32>
    %7 = vector.broadcast %6 : vector<1x128xf32> to vector<16x128xf32>
    %8 = arith.addf %5, %7 : vector<16x128xf32>
    %cst_6 = arith.constant 5.000000e-01 : f32
    %9 = vector.broadcast %cst_6 : f32 to vector<16x128xf32>
    %10 = arith.mulf %9, %8 : vector<16x128xf32>
    %cst_7 = arith.constant 0.707106769 : f32
    %11 = vector.broadcast %cst_7 : f32 to vector<16x128xf32>
    %12 = arith.mulf %8, %11 : vector<16x128xf32>
    %13 = math.erf %12 : vector<16x128xf32>
    %cst_8 = arith.constant 1.000000e+00 : f32
    %14 = vector.broadcast %cst_8 : f32 to vector<16x128xf32>
    %15 = arith.addf %14, %13 : vector<16x128xf32>
    %16 = arith.mulf %10, %15 : vector<16x128xf32>
    %c0_9 = arith.constant 0 : index
    %c0_10 = arith.constant 0 : index
    %17 = vector.load %arg8[%c0_9, %c0_10] : memref<16x32xf32, #tpu.memory_space<vmem>>, vector<16x32xf32>
    %c0_11 = arith.constant 0 : index
    %c0_12 = arith.constant 0 : index
    %18 = vector.load %arg6[%c0_11, %c0_12] : memref<128x32xf32, #tpu.memory_space<vmem>>, vector<128x32xf32>
    %cst_13 = arith.constant dense<0.000000e+00> : vector<16x32xf32>
    %19 = tpu.matmul %16, %18, %cst_13 {dimension_numbers = #tpu.dot_dimension_numbers<[1], [0], [0], [1], [0, 0, 1, 1], [], []>} : vector<16x128xf32>, vector<128x32xf32>, vector<16x32xf32> -> vector<16x32xf32>
    %20 = arith.addf %17, %19 : vector<16x32xf32>
    %c0_14 = arith.constant 0 : index
    %c0_15 = arith.constant 0 : index
    %21 = vector.load %arg8[%c0_14, %c0_15] : memref<16x32xf32, #tpu.memory_space<vmem>>, vector<16x32xf32>
    tpu.vector_store %arg8[%c0_14, %c0_15], %20 {strides = array<i32>} : memref<16x32xf32, #tpu.memory_space<vmem>>, vector<16x32xf32>,
    %c0_i32_16 = arith.constant 0 : i32
    %22 = arith.cmpi eq, %arg2, %c0_i32_16 : i32
    %23 = arith.extui %22 : i1 to i32
    %c0_i32_17 = arith.constant 0 : i32
    %24 = arith.cmpi ne, %23, %c0_i32_17 : i32
    scf.if %24 {
      %c0_18 = arith.constant 0 : index
      %c0_19 = arith.constant 0 : index
      %25 = vector.load %arg8[%c0_18, %c0_19] : memref<16x32xf32, #tpu.memory_space<vmem>>, vector<16x32xf32>
      %c0_20 = arith.constant 0 : index
      %c0_21 = arith.constant 0 : index
      %26 = vector.load %arg7[%c0_20, %c0_21] : memref<1x32xf32, #tpu.memory_space<vmem>>, vector<1x32xf32>
      %27 = vector.broadcast %26 : vector<1x32xf32> to vector<16x32xf32>
      %28 = arith.addf %25, %27 : vector<16x32xf32>
      %c0_22 = arith.constant 0 : index
      %c0_23 = arith.constant 0 : index
      %29 = vector.load %arg8[%c0_22, %c0_23] : memref<16x32xf32, #tpu.memory_space<vmem>>, vector<16x32xf32>
      tpu.vector_store %arg8[%c0_22, %c0_23], %28 {strides = array<i32>} : memref<16x32xf32, #tpu.memory_space<vmem>>, vector<16x32xf32>,
    } else {
    }
    return
  }
  func.func @transform_0(%arg0: i32, %arg1: i32, %arg2: i32) -> (i32, i32) {
    %c0_i32 = arith.constant 0 : i32
    %c0_i32_0 = arith.constant 0 : i32
    return %arg0, %c0_i32 : i32, i32
  }
  func.func @transform_1(%arg0: i32, %arg1: i32, %arg2: i32) -> (i32, i32) {
    %c0_i32 = arith.constant 0 : i32
    %c0_i32_0 = arith.constant 0 : i32
    return %c0_i32, %arg2 : i32, i32
  }
  func.func @transform_2(%arg0: i32, %arg1: i32, %arg2: i32) -> (i32, i32) {
    %c0_i32 = arith.constant 0 : i32
    %c0_i32_0 = arith.constant 0 : i32
    return %c0_i32, %arg2 : i32, i32
  }
  func.func @transform_3(%arg0: i32, %arg1: i32, %arg2: i32) -> (i32, i32) {
    %c0_i32 = arith.constant 0 : i32
    return %arg2, %arg1 : i32, i32
  }
  func.func @transform_4(%arg0: i32, %arg1: i32, %arg2: i32) -> (i32, i32) {
    %c0_i32 = arith.constant 0 : i32
    %c0_i32_0 = arith.constant 0 : i32
    return %c0_i32, %arg1 : i32, i32
  }
  func.func @transform_5(%arg0: i32, %arg1: i32, %arg2: i32) -> (i32, i32) {
    %c0_i32 = arith.constant 0 : i32
    return %arg0, %arg1 : i32, i32
  }
}

</mosaic_0001>

<llo_original>
// kernel: tpu_custom_call.1
$region0: #{tpu_custom_call.1}
  #allocation0 [shape = 'u32[]', space=smem, size = 0x4, offset = 0x4, fixed_abs, tag = 'smem constant byte address 0x4 - core index']
  #allocation1 [shape = 'u32[144,128]{1,0:T(1,128)}', space=vmem, size = 0x12000, scoped, tag = 'internal scratch']
  %s0 = inlined_call_operand.vmem [shape: f32[16,32], index: 0, kind: input, shape index: {}]
  %s1 = inlined_call_operand.vmem [shape: f32[32,128], index: 1, kind: input, shape index: {}]
  %s2 = inlined_call_operand.vmem [shape: f32[1,128], index: 2, kind: input, shape index: {}]
  %s3 = inlined_call_operand.vmem [shape: f32[128,32], index: 3, kind: input, shape index: {}]
  %s4 = inlined_call_operand.vmem [shape: f32[1,32], index: 4, kind: input, shape index: {}]
  %s5 = inlined_call_operand.hbm [shape: f32[16,32], index: 5, kind: output, shape index: {}]
  %s6 = sld [smem:[#allocation0]]
  $region38: #{tpu_custom_call.1} parent=0
    _
  %s8 = ssub.s32 1, %s6
  %s9 = scalar_select 0, %s8, %s6
  $region1: #{tpu_custom_call.1} parent=0
    #allocation2 [shape = 'u8[8192]{0}', space=vmem, size = 0x2000, scoped, tag = 'output window, operand 0, single buffered']
    #allocation3 [shape = 's32[1]{0}', space=sflag, size = 0x4, scoped, tag = 'scoped memory for tpu_custom_call.1']
    %10 = vsyncpa [#allocation3], 0
    // Predicated region
    $region2: #{tpu_custom_call.1} parent=1 // pred_check
      _
    $region3: #{tpu_custom_call.1} parent=1 // pred_check_branch
      %12 = sbr.rel (0) target = $region5
    $region4: #{tpu_custom_call.1} parent=1 // pred_region
      _
    $region5: #{tpu_custom_call.1} parent=1 // pred_fallthru
      _
    // Predicated region
    $region6: #{tpu_custom_call.1} parent=1 // pred_check
      _
    $region7: #{tpu_custom_call.1} parent=1 // pred_check_branch
      %14 = sbr.rel (0) target = $region9
    $region8: #{tpu_custom_call.1} parent=1 // pred_region
      _
    $region9: #{tpu_custom_call.1} parent=1 // pred_fallthru
      _
    // Predicated region
    $region10: #{tpu_custom_call.1} parent=1 // pred_check
      _
    $region11: #{tpu_custom_call.1} parent=1 // pred_check_branch
      %16 = sbr.rel (0) target = $region13
    $region12: #{tpu_custom_call.1} parent=1 // pred_region
      _
    $region13: #{tpu_custom_call.1} parent=1 // pred_fallthru
      _
    // Predicated region
    $region14: #{tpu_custom_call.1} parent=1 // pred_check
      _
    $region15: #{tpu_custom_call.1} parent=1 // pred_check_branch
      %18 = sbr.rel (0) target = $region17
    $region16: #{tpu_custom_call.1} parent=1 // pred_region
      _
    $region17: #{tpu_custom_call.1} parent=1 // pred_fallthru
      _
    // Predicated region
    $region18: #{tpu_custom_call.1} parent=1 // pred_check
      _
    $region19: #{tpu_custom_call.1} parent=1 // pred_check_branch
      %20 = sbr.rel (0) target = $region21
    $region20: #{tpu_custom_call.1} parent=1 // pred_region
      _
    $region21: #{tpu_custom_call.1} parent=1 // pred_fallthru
      _
    %p21 = scmp.eq.s32.totalorder 0, 0
    // Predicated region
    $region22: #{tpu_custom_call.1} parent=1 // pred_check
      %p22 = pneg %p21
    $region23: #{tpu_custom_call.1} parent=1 // pred_check_branch
      %24 = sbr.rel (%p22) target = $region25
    $region24: #{tpu_custom_call.1} parent=1 // pred_region
      %vm25 = vcmask 261120
      %26 = vst.msk [vmem:[#allocation2] sm:$0xff] %vm25, 0.0
      %27 = vst.msk [vmem:[#allocation2 + $0x8] sm:$0xff] %vm25, 0.0
    $region25: #{tpu_custom_call.1} parent=1 // pred_fallthru
      _
    %v28 = vld [vmem:[%s0] sm:$0xff]
    %v29 = vld [vmem:[%s0 + $0x8] sm:$0xff]
    %v30 = vld [vmem:[%s1] sm:$0xff]
    %v31 = vld [vmem:[%s1 + $0x8] sm:$0xff]
    %v32 = vld [vmem:[%s1 + $0x10] sm:$0xff]
    %v33 = vld [vmem:[%s1 + $0x18] sm:$0xff]
    %v34 = vld [vmem:[%s2] sm:$0x1]
    %v36 = vlaneseq
    %v37 = vshrl.u32 %v36, 7
    %v38 = vsub.s32 0, %v37
    %v39 = vrot.slane %v34, %v38
    %vm41 = vcmask 261120
    %v43 = vsel %vm41, %v28, 0
    %v46 = vsel %vm41, %v29, 0
    %48 = vmatprep.subr.mxu0 0.0
    %49 = vmatpush1.msra.mxu0 %v30
    %50 = vmatprep.subr.mxu0 0.0
    %51 = vmatpush1.msra.mxu0 %v31
    %52 = vmatprep.subr.mxu0 0.0
    %53 = vmatpush1.msra.mxu0 %v32
    %54 = vmatprep.subr.mxu0 0.0
    %55 = vmatpush1.msra.mxu0 %v33
    %56 = vmatprep.subr.mxu0 0.0
    %57 = vmatpush1.msra.mxu0 0.0
    %58 = vmatprep.subr.mxu0 0.0
    %59 = vmatpush1.msra.mxu0 0.0
    %60 = vmatprep.subr.mxu0 0.0
    %61 = vmatpush1.msra.mxu0 0.0
    %62 = vmatprep.subr.mxu0 0.0
    %63 = vmatpush1.msra.mxu0 0.0
    %64 = vmatprep.subr.mxu0 0.0
    %65 = vmatpush1.msra.mxu0 0.0
    %66 = vmatprep.subr.mxu0 0.0
    %67 = vmatpush1.msra.mxu0 0.0
    %68 = vmatprep.subr.mxu0 0.0
    %69 = vmatpush1.msra.mxu0 0.0
    %70 = vmatprep.subr.mxu0 0.0
    %71 = vmatpush1.msra.mxu0 0.0
    %72 = vmatprep.subr.mxu0 0.0
    %73 = vmatpush1.msra.mxu0 0.0
    %74 = vmatprep.subr.mxu0 0.0
    %75 = vmatpush1.msra.mxu0 0.0
    %76 = vmatprep.subr.mxu0 0.0
    %77 = vmatpush1.msra.mxu0 0.0
    %78 = vmatprep.subr.mxu0 0.0
    %79 = vmatpush1.msra.mxu0 0.0
    %80 = vmatprep.subr.mxu0 0.0
    %81 = vmatpush1.msra.mxu0 0.0
    %82 = vmatprep.subr.mxu0 0.0
    %83 = vmatpush1.msra.mxu0 0.0
    %84 = vmatprep.subr.mxu0 0.0
    %85 = vmatpush1.msra.mxu0 0.0
    %86 = vmatprep.subr.mxu0 0.0
    %87 = vmatpush1.msra.mxu0 0.0
    %88 = vmatprep.subr.mxu0 0.0
    %89 = vmatpush1.msra.mxu0 0.0
    %90 = vmatprep.subr.mxu0 0.0
    %91 = vmatpush1.msra.mxu0 0.0
    %92 = vmatprep.subr.mxu0 0.0
    %93 = vmatpush1.msra.mxu0 0.0
    %94 = vmatprep.subr.mxu0 0.0
    %95 = vmatpush1.msra.mxu0 0.0
    %96 = vmatprep.subr.mxu0 0.0
    %97 = vmatpush1.msra.mxu0 0.0
    %98 = vmatprep.subr.mxu0 0.0
    %99 = vmatpush1.msra.mxu0 0.0
    %100 = vmatprep.subr.mxu0 0.0
    %101 = vmatpush1.msra.mxu0 0.0
    %102 = vmatprep.subr.mxu0 0.0
    %103 = vmatpush1.msra.mxu0 0.0
    %104 = vmatprep.subr.mxu0 0.0
    %105 = vmatpush1.msra.mxu0 0.0
    %106 = vmatprep.subr.mxu0 0.0
    %107 = vmatpush1.msra.mxu0 0.0
    %108 = vmatprep.subr.mxu0 0.0
    %109 = vmatpush1.msra.mxu0 0.0
    %110 = vmatprep.subr.mxu0 0.0
    %111 = vmatpush1.msra.mxu0 0.0
    %112 = vmatprep.mubr.f32.mxu0 0.0
    %113 = vmatmul.mubr.f32.gmra.mrb[0].mxu0 %v43
    %v114 = vpop.f32.mrb[0].mxu0
    %v115 = vadd.f32 %v39, %v114
    %v116 = vpop.f32.mrb[0].mxu0
    %117 = vmatprep.mubr.f32.mxu0 0.0
    %118 = vmatmul.mubr.f32.gmra.mrb[0].mxu0 %v46
    %v119 = vpop.f32.mrb[0].mxu0
    %v120 = vadd.f32 %v39, %v119
    %v121 = vpop.f32.mrb[0].mxu0
    %122 = vdwg.mxu0
    %v123 = vmul.f32 %v115, 0.5
    %v124 = vmul.f32 %v120, 0.5
    %v125 = vmul.f32 %v115, 0.70710677
    %v126 = vmul.f32 %v120, 0.70710677
    %v127 = verf.f32.pop %v125
    %v128 = verf.f32.pop %v126
    %v129 = vadd.f32 %v127, 1.0
    %v130 = vadd.f32 %v128, 1.0
    %v131 = vmul.f32 %v123, %v129
    %v132 = vmul.f32 %v124, %v130
    %v133 = vld [vmem:[#allocation2] sm:$0xff]
    %v134 = vld [vmem:[#allocation2 + $0x8] sm:$0xff]
    %v135 = vld [vmem:[%s3] sm:$0xff]
    %v136 = vld [vmem:[%s3 + $0x8] sm:$0xff]
    %v137 = vld [vmem:[%s3 + $0x10] sm:$0xff]
    %v138 = vld [vmem:[%s3 + $0x18] sm:$0xff]
    %v139 = vld [vmem:[%s3 + $0x20] sm:$0xff]
    %v140 = vld [vmem:[%s3 + $0x28] sm:$0xff]
    %v141 = vld [vmem:[%s3 + $0x30] sm:$0xff]
    %v142 = vld [vmem:[%s3 + $0x38] sm:$0xff]
    %v143 = vld [vmem:[%s3 + $0x40] sm:$0xff]
    %v144 = vld [vmem:[%s3 + $0x48] sm:$0xff]
    %v145 = vld [vmem:[%s3 + $0x50] sm:$0xff]
    %v146 = vld [vmem:[%s3 + $0x58] sm:$0xff]
    %v147 = vld [vmem:[%s3 + $0x60] sm:$0xff]
    %v148 = vld [vmem:[%s3 + $0x68] sm:$0xff]
    %v149 = vld [vmem:[%s3 + $0x70] sm:$0xff]
    %v150 = vld [vmem:[%s3 + $0x78] sm:$0xff]
    %151 = vmatprep.subr.mxu0 0.0
    %152 = vmatpush1.msra.mxu0 %v135
    %153 = vmatprep.subr.mxu0 0.0
    %154 = vmatpush1.msra.mxu0 %v136
    %155 = vmatprep.subr.mxu0 0.0
    %156 = vmatpush1.msra.mxu0 %v137
    %157 = vmatprep.subr.mxu0 0.0
    %158 = vmatpush1.msra.mxu0 %v138
    %159 = vmatprep.subr.mxu0 0.0
    %160 = vmatpush1.msra.mxu0 %v139
    %161 = vmatprep.subr.mxu0 0.0
    %162 = vmatpush1.msra.mxu0 %v140
    %163 = vmatprep.subr.mxu0 0.0
    %164 = vmatpush1.msra.mxu0 %v141
    %165 = vmatprep.subr.mxu0 0.0
    %166 = vmatpush1.msra.mxu0 %v142
    %167 = vmatprep.subr.mxu0 0.0
    %168 = vmatpush1.msra.mxu0 %v143
    %169 = vmatprep.subr.mxu0 0.0
    %170 = vmatpush1.msra.mxu0 %v144
    %171 = vmatprep.subr.mxu0 0.0
    %172 = vmatpush1.msra.mxu0 %v145
    %173 = vmatprep.subr.mxu0 0.0
    %174 = vmatpush1.msra.mxu0 %v146
    %175 = vmatprep.subr.mxu0 0.0
    %176 = vmatpush1.msra.mxu0 %v147
    %177 = vmatprep.subr.mxu0 0.0
    %178 = vmatpush1.msra.mxu0 %v148
    %179 = vmatprep.subr.mxu0 0.0
    %180 = vmatpush1.msra.mxu0 %v149
    %181 = vmatprep.subr.mxu0 0.0
    %182 = vmatpush1.msra.mxu0 %v150
    %183 = vmatprep.subr.mxu0 0.0
    %184 = vmatpush1.msra.mxu0 0.0
    %185 = vmatprep.subr.mxu0 0.0
    %186 = vmatpush1.msra.mxu0 0.0
    %187 = vmatprep.subr.mxu0 0.0
    %188 = vmatpush1.msra.mxu0 0.0
    %189 = vmatprep.subr.mxu0 0.0
    %190 = vmatpush1.msra.mxu0 0.0
    %191 = vmatprep.subr.mxu0 0.0
    %192 = vmatpush1.msra.mxu0 0.0
    %193 = vmatprep.subr.mxu0 0.0
    %194 = vmatpush1.msra.mxu0 0.0
    %195 = vmatprep.subr.mxu0 0.0
    %196 = vmatpush1.msra.mxu0 0.0
    %197 = vmatprep.subr.mxu0 0.0
    %198 = vmatpush1.msra.mxu0 0.0
    %199 = vmatprep.subr.mxu0 0.0
    %200 = vmatpush1.msra.mxu0 0.0
    %201 = vmatprep.subr.mxu0 0.0
    %202 = vmatpush1.msra.mxu0 0.0
    %203 = vmatprep.subr.mxu0 0.0
    %204 = vmatpush1.msra.mxu0 0.0
    %205 = vmatprep.subr.mxu0 0.0
    %206 = vmatpush1.msra.mxu0 0.0
    %207 = vmatprep.subr.mxu0 0.0
    %208 = vmatpush1.msra.mxu0 0.0
    %209 = vmatprep.subr.mxu0 0.0
    %210 = vmatpush1.msra.mxu0 0.0
    %211 = vmatprep.subr.mxu0 0.0
    %212 = vmatpush1.msra.mxu0 0.0
    %213 = vmatprep.subr.mxu0 0.0
    %214 = vmatpush1.msra.mxu0 0.0
    %215 = vmatprep.mubr.f32.mxu0 0.0
    %216 = vmatmul.mubr.f32.gmra.mrb[0].mxu0 %v131
    %v217 = vpop.f32.mrb[0].mxu0
    %v218 = vadd.f32 0.0, %v217
    %v219 = vpop.f32.mrb[0].mxu0
    %220 = vmatprep.mubr.f32.mxu0 0.0
    %221 = vmatmul.mubr.f32.gmra.mrb[0].mxu0 %v132
    %v222 = vpop.f32.mrb[0].mxu0
    %v223 = vadd.f32 0.0, %v222
    %v224 = vpop.f32.mrb[0].mxu0
    %225 = vdwg.mxu0
    %v226 = vadd.f32 %v133, %v218
    %v227 = vadd.f32 %v134, %v223
    %228 = vst.msk [vmem:[#allocation2] sm:$0xff] %vm41, %v226
    %229 = vst.msk [vmem:[#allocation2 + $0x8] sm:$0xff] %vm41, %v227
    // Predicated region
    $region26: #{tpu_custom_call.1} parent=1 // pred_check
      %p230 = pneg %p21
    $region27: #{tpu_custom_call.1} parent=1 // pred_check_branch
      %232 = sbr.rel (%p230) target = $region29
    $region28: #{tpu_custom_call.1} parent=1 // pred_region
      %v233 = vld [vmem:[#allocation2] sm:$0xff]
      %v234 = vld [vmem:[#allocation2 + $0x8] sm:$0xff]
      %v235 = vld [vmem:[%s4] sm:$0x1]
      %v237 = vlaneseq
      %v238 = vshrl.u32 %v237, 7
      %v239 = vsub.s32 0, %v238
      %v240 = vrot.slane %v235, %v239
      %v242 = vadd.f32 %v233, %v240
      %v243 = vadd.f32 %v234, %v240
      %244 = vst.msk [vmem:[#allocation2] sm:$0xff] %vm41, %v242
      %245 = vst.msk [vmem:[#allocation2 + $0x8] sm:$0xff] %vm41, %v243
    $region29: #{tpu_custom_call.1} parent=1 // pred_fallthru
      _
    // Predicated region
    $region30: #{tpu_custom_call.1} parent=1 // pred_check
      _
    $region31: #{tpu_custom_call.1} parent=1 // pred_check_branch
      %247 = sbr.rel (0) target = $region33
    $region32: #{tpu_custom_call.1} parent=1 // pred_region
      %s249 = ssub.s32 256, 256
      %250 = vsyncadd [#allocation3], %s249
      %s251 = sshll.u32 [#allocation2], 4
      %s252 = int_to_ptr.vmem [resolvable:$true] %s251
      %257 = dma.vmem_to_hbm [thread:$0]  %s252, 256, %s5, [#allocation3], 128, 128, 8
    $region33: #{tpu_custom_call.1} parent=1 // pred_fallthru
      _
    // Predicated region
    $region34: #{tpu_custom_call.1} parent=1 // pred_check
      _
    $region35: #{tpu_custom_call.1} parent=1 // pred_check_branch
      %259 = sbr.rel (0) target = $region37
    $region36: #{tpu_custom_call.1} parent=1 // pred_region
      %260 = dma.done [#allocation3], 256
    $region37: #{tpu_custom_call.1} parent=1 // pred_fallthru
      _
    %261 = vsyncpa [#allocation3], 1

// kernel: tpu_custom_call.1
$region0: #{tpu_custom_call.1}
  #allocation0 [shape = 'u32[]', space=smem, size = 0x4, offset = 0x4, fixed_abs, tag = 'smem constant byte address 0x4 - core index']
  #allocation1 [shape = 'u32[144,128]{1,0:T(1,128)}', space=vmem, size = 0x12000, scoped, tag = 'internal scratch']
  %s0 = inlined_call_operand.vmem [shape: f32[16,32], index: 0, kind: input, shape index: {}]
  %s1 = inlined_call_operand.vmem [shape: f32[32,128], index: 1, kind: input, shape index: {}]
  %s2 = inlined_call_operand.vmem [shape: f32[1,128], index: 2, kind: input, shape index: {}]
  %s3 = inlined_call_operand.vmem [shape: f32[128,32], index: 3, kind: input, shape index: {}]
  %s4 = inlined_call_operand.vmem [shape: f32[1,32], index: 4, kind: input, shape index: {}]
  %s5 = inlined_call_operand.hbm [shape: f32[16,32], index: 5, kind: output, shape index: {}]
  %s6 = sld [smem:[#allocation0]]
  $region38: #{tpu_custom_call.1} parent=0
    _
  %s8 = ssub.s32 1, %s6
  %s9 = scalar_select 0, %s8, %s6
  $region1: #{tpu_custom_call.1} parent=0
    #allocation2 [shape = 'u8[8192]{0}', space=vmem, size = 0x2000, scoped, tag = 'output window, operand 0, single buffered']
    #allocation3 [shape = 's32[1]{0}', space=sflag, size = 0x4, scoped, tag = 'scoped memory for tpu_custom_call.1']
    %10 = vsyncpa [#allocation3], 0
    // Predicated region
    $region2: #{tpu_custom_call.1} parent=1 // pred_check
      _
    $region3: #{tpu_custom_call.1} parent=1 // pred_check_branch
      %12 = sbr.rel (0) target = $region5
    $region4: #{tpu_custom_call.1} parent=1 // pred_region
      _
    $region5: #{tpu_custom_call.1} parent=1 // pred_fallthru
      _
    // Predicated region
    $region6: #{tpu_custom_call.1} parent=1 // pred_check
      _
    $region7: #{tpu_custom_call.1} parent=1 // pred_check_branch
      %14 = sbr.rel (0) target = $region9
    $region8: #{tpu_custom_call.1} parent=1 // pred_region
      _
    $region9: #{tpu_custom_call.1} parent=1 // pred_fallthru
      _
    // Predicated region
    $region10: #{tpu_custom_call.1} parent=1 // pred_check
      _
    $region11: #{tpu_custom_call.1} parent=1 // pred_check_branch
      %16 = sbr.rel (0) target = $region13
    $region12: #{tpu_custom_call.1} parent=1 // pred_region
      _
    $region13: #{tpu_custom_call.1} parent=1 // pred_fallthru
      _
    // Predicated region
    $region14: #{tpu_custom_call.1} parent=1 // pred_check
      _
    $region15: #{tpu_custom_call.1} parent=1 // pred_check_branch
      %18 = sbr.rel (0) target = $region17
    $region16: #{tpu_custom_call.1} parent=1 // pred_region
      _
    $region17: #{tpu_custom_call.1} parent=1 // pred_fallthru
      _
    // Predicated region
    $region18: #{tpu_custom_call.1} parent=1 // pred_check
      _
    $region19: #{tpu_custom_call.1} parent=1 // pred_check_branch
      %20 = sbr.rel (0) target = $region21
    $region20: #{tpu_custom_call.1} parent=1 // pred_region
      _
    $region21: #{tpu_custom_call.1} parent=1 // pred_fallthru
      _
    %p21 = scmp.eq.s32.totalorder 0, 0
    // Predicated region
    $region22: #{tpu_custom_call.1} parent=1 // pred_check
      %p22 = pneg %p21
    $region23: #{tpu_custom_call.1} parent=1 // pred_check_branch
      %24 = sbr.rel (%p22) target = $region25
    $region24: #{tpu_custom_call.1} parent=1 // pred_region
      %vm25 = vcmask 261120
      %26 = vst.msk [vmem:[#allocation2] sm:$0xff] %vm25, 0.0
      %27 = vst.msk [vmem:[#allocation2 + $0x8] sm:$0xff] %vm25, 0.0
    $region25: #{tpu_custom_call.1} parent=1 // pred_fallthru
      _
    %v28 = vld [vmem:[%s0] sm:$0xff]
    %v29 = vld [vmem:[%s0 + $0x8] sm:$0xff]
    %v30 = vld [vmem:[%s1] sm:$0xff]
    %v31 = vld [vmem:[%s1 + $0x8] sm:$0xff]
    %v32 = vld [vmem:[%s1 + $0x10] sm:$0xff]
    %v33 = vld [vmem:[%s1 + $0x18] sm:$0xff]
    %v34 = vld [vmem:[%s2] sm:$0x1]
    %v36 = vlaneseq
    %v37 = vshrl.u32 %v36, 7
    %v38 = vsub.s32 0, %v37
    %v39 = vrot.slane %v34, %v38
    %vm41 = vcmask 261120
    %v43 = vsel %vm41, %v28, 0
    %v46 = vsel %vm41, %v29, 0
    %48 = vmatprep.subr.mxu0 0.0
    %49 = vmatpush1.msra.mxu0 %v30
    %50 = vmatprep.subr.mxu0 0.0
    %51 = vmatpush1.msra.mxu0 %v31
    %52 = vmatprep.subr.mxu0 0.0
    %53 = vmatpush1.msra.mxu0 %v32
    %54 = vmatprep.subr.mxu0 0.0
    %55 = vmatpush1.msra.mxu0 %v33
    %56 = vmatprep.subr.mxu0 0.0
    %57 = vmatpush1.msra.mxu0 0.0
    %58 = vmatprep.subr.mxu0 0.0
    %59 = vmatpush1.msra.mxu0 0.0
    %60 = vmatprep.subr.mxu0 0.0
    %61 = vmatpush1.msra.mxu0 0.0
    %62 = vmatprep.subr.mxu0 0.0
    %63 = vmatpush1.msra.mxu0 0.0
    %64 = vmatprep.subr.mxu0 0.0
    %65 = vmatpush1.msra.mxu0 0.0
    %66 = vmatprep.subr.mxu0 0.0
    %67 = vmatpush1.msra.mxu0 0.0
    %68 = vmatprep.subr.mxu0 0.0
    %69 = vmatpush1.msra.mxu0 0.0
    %70 = vmatprep.subr.mxu0 0.0
    %71 = vmatpush1.msra.mxu0 0.0
    %72 = vmatprep.subr.mxu0 0.0
    %73 = vmatpush1.msra.mxu0 0.0
    %74 = vmatprep.subr.mxu0 0.0
    %75 = vmatpush1.msra.mxu0 0.0
    %76 = vmatprep.subr.mxu0 0.0
    %77 = vmatpush1.msra.mxu0 0.0
    %78 = vmatprep.subr.mxu0 0.0
    %79 = vmatpush1.msra.mxu0 0.0
    %80 = vmatprep.subr.mxu0 0.0
    %81 = vmatpush1.msra.mxu0 0.0
    %82 = vmatprep.subr.mxu0 0.0
    %83 = vmatpush1.msra.mxu0 0.0
    %84 = vmatprep.subr.mxu0 0.0
    %85 = vmatpush1.msra.mxu0 0.0
    %86 = vmatprep.subr.mxu0 0.0
    %87 = vmatpush1.msra.mxu0 0.0
    %88 = vmatprep.subr.mxu0 0.0
    %89 = vmatpush1.msra.mxu0 0.0
    %90 = vmatprep.subr.mxu0 0.0
    %91 = vmatpush1.msra.mxu0 0.0
    %92 = vmatprep.subr.mxu0 0.0
    %93 = vmatpush1.msra.mxu0 0.0
    %94 = vmatprep.subr.mxu0 0.0
    %95 = vmatpush1.msra.mxu0 0.0
    %96 = vmatprep.subr.mxu0 0.0
    %97 = vmatpush1.msra.mxu0 0.0
    %98 = vmatprep.subr.mxu0 0.0
    %99 = vmatpush1.msra.mxu0 0.0
    %100 = vmatprep.subr.mxu0 0.0
    %101 = vmatpush1.msra.mxu0 0.0
    %102 = vmatprep.subr.mxu0 0.0
    %103 = vmatpush1.msra.mxu0 0.0
    %104 = vmatprep.subr.mxu0 0.0
    %105 = vmatpush1.msra.mxu0 0.0
    %106 = vmatprep.subr.mxu0 0.0
    %107 = vmatpush1.msra.mxu0 0.0
    %108 = vmatprep.subr.mxu0 0.0
    %109 = vmatpush1.msra.mxu0 0.0
    %110 = vmatprep.subr.mxu0 0.0
    %111 = vmatpush1.msra.mxu0 0.0
    %112 = vmatprep.mubr.f32.mxu0 0.0
    %113 = vmatmul.mubr.f32.gmra.mrb[0].mxu0 %v43
    %v114 = vpop.f32.mrb[0].mxu0
    %v115 = vadd.f32 %v39, %v114
    %v116 = vpop.f32.mrb[0].mxu0
    %117 = vmatprep.mubr.f32.mxu0 0.0
    %118 = vmatmul.mubr.f32.gmra.mrb[0].mxu0 %v46
    %v119 = vpop.f32.mrb[0].mxu0
    %v120 = vadd.f32 %v39, %v119
    %v121 = vpop.f32.mrb[0].mxu0
    %122 = vdwg.mxu0
    %v123 = vmul.f32 %v115, 0.5
    %v124 = vmul.f32 %v120, 0.5
    %v125 = vmul.f32 %v115, 0.70710677
    %v126 = vmul.f32 %v120, 0.70710677
    %v127 = verf.f32.pop %v125
    %v128 = verf.f32.pop %v126
    %v129 = vadd.f32 %v127, 1.0
    %v130 = vadd.f32 %v128, 1.0
    %v131 = vmul.f32 %v123, %v129
    %v132 = vmul.f32 %v124, %v130
    %v133 = vld [vmem:[#allocation2] sm:$0xff]
    %v134 = vld [vmem:[#allocation2 + $0x8] sm:$0xff]
    %v135 = vld [vmem:[%s3] sm:$0xff]
    %v136 = vld [vmem:[%s3 + $0x8] sm:$0xff]
    %v137 = vld [vmem:[%s3 + $0x10] sm:$0xff]
    %v138 = vld [vmem:[%s3 + $0x18] sm:$0xff]
    %v139 = vld [vmem:[%s3 + $0x20] sm:$0xff]
    %v140 = vld [vmem:[%s3 + $0x28] sm:$0xff]
    %v141 = vld [vmem:[%s3 + $0x30] sm:$0xff]
    %v142 = vld [vmem:[%s3 + $0x38] sm:$0xff]
    %v143 = vld [vmem:[%s3 + $0x40] sm:$0xff]
    %v144 = vld [vmem:[%s3 + $0x48] sm:$0xff]
    %v145 = vld [vmem:[%s3 + $0x50] sm:$0xff]
    %v146 = vld [vmem:[%s3 + $0x58] sm:$0xff]
    %v147 = vld [vmem:[%s3 + $0x60] sm:$0xff]
    %v148 = vld [vmem:[%s3 + $0x68] sm:$0xff]
    %v149 = vld [vmem:[%s3 + $0x70] sm:$0xff]
    %v150 = vld [vmem:[%s3 + $0x78] sm:$0xff]
    %151 = vmatprep.subr.mxu0 0.0
    %152 = vmatpush1.msra.mxu0 %v135
    %153 = vmatprep.subr.mxu0 0.0
    %154 = vmatpush1.msra.mxu0 %v136
    %155 = vmatprep.subr.mxu0 0.0
    %156 = vmatpush1.msra.mxu0 %v137
    %157 = vmatprep.subr.mxu0 0.0
    %158 = vmatpush1.msra.mxu0 %v138
    %159 = vmatprep.subr.mxu0 0.0
    %160 = vmatpush1.msra.mxu0 %v139
    %161 = vmatprep.subr.mxu0 0.0
    %162 = vmatpush1.msra.mxu0 %v140
    %163 = vmatprep.subr.mxu0 0.0
    %164 = vmatpush1.msra.mxu0 %v141
    %165 = vmatprep.subr.mxu0 0.0
    %166 = vmatpush1.msra.mxu0 %v142
    %167 = vmatprep.subr.mxu0 0.0
    %168 = vmatpush1.msra.mxu0 %v143
    %169 = vmatprep.subr.mxu0 0.0
    %170 = vmatpush1.msra.mxu0 %v144
    %171 = vmatprep.subr.mxu0 0.0
    %172 = vmatpush1.msra.mxu0 %v145
    %173 = vmatprep.subr.mxu0 0.0
    %174 = vmatpush1.msra.mxu0 %v146
    %175 = vmatprep.subr.mxu0 0.0
    %176 = vmatpush1.msra.mxu0 %v147
    %177 = vmatprep.subr.mxu0 0.0
    %178 = vmatpush1.msra.mxu0 %v148
    %179 = vmatprep.subr.mxu0 0.0
    %180 = vmatpush1.msra.mxu0 %v149
    %181 = vmatprep.subr.mxu0 0.0
    %182 = vmatpush1.msra.mxu0 %v150
    %183 = vmatprep.subr.mxu0 0.0
    %184 = vmatpush1.msra.mxu0 0.0
    %185 = vmatprep.subr.mxu0 0.0
    %186 = vmatpush1.msra.mxu0 0.0
    %187 = vmatprep.subr.mxu0 0.0
    %188 = vmatpush1.msra.mxu0 0.0
    %189 = vmatprep.subr.mxu0 0.0
    %190 = vmatpush1.msra.mxu0 0.0
    %191 = vmatprep.subr.mxu0 0.0
    %192 = vmatpush1.msra.mxu0 0.0
    %193 = vmatprep.subr.mxu0 0.0
    %194 = vmatpush1.msra.mxu0 0.0
    %195 = vmatprep.subr.mxu0 0.0
    %196 = vmatpush1.msra.mxu0 0.0
    %197 = vmatprep.subr.mxu0 0.0
    %198 = vmatpush1.msra.mxu0 0.0
    %199 = vmatprep.subr.mxu0 0.0
    %200 = vmatpush1.msra.mxu0 0.0
    %201 = vmatprep.subr.mxu0 0.0
    %202 = vmatpush1.msra.mxu0 0.0
    %203 = vmatprep.subr.mxu0 0.0
    %204 = vmatpush1.msra.mxu0 0.0
    %205 = vmatprep.subr.mxu0 0.0
    %206 = vmatpush1.msra.mxu0 0.0
    %207 = vmatprep.subr.mxu0 0.0
    %208 = vmatpush1.msra.mxu0 0.0
    %209 = vmatprep.subr.mxu0 0.0
    %210 = vmatpush1.msra.mxu0 0.0
    %211 = vmatprep.subr.mxu0 0.0
    %212 = vmatpush1.msra.mxu0 0.0
    %213 = vmatprep.subr.mxu0 0.0
    %214 = vmatpush1.msra.mxu0 0.0
    %215 = vmatprep.mubr.f32.mxu0 0.0
    %216 = vmatmul.mubr.f32.gmra.mrb[0].mxu0 %v131
    %v217 = vpop.f32.mrb[0].mxu0
    %v218 = vadd.f32 0.0, %v217
    %v219 = vpop.f32.mrb[0].mxu0
    %220 = vmatprep.mubr.f32.mxu0 0.0
    %221 = vmatmul.mubr.f32.gmra.mrb[0].mxu0 %v132
    %v222 = vpop.f32.mrb[0].mxu0
    %v223 = vadd.f32 0.0, %v222
    %v224 = vpop.f32.mrb[0].mxu0
    %225 = vdwg.mxu0
    %v226 = vadd.f32 %v133, %v218
    %v227 = vadd.f32 %v134, %v223
    %228 = vst.msk [vmem:[#allocation2] sm:$0xff] %vm41, %v226
    %229 = vst.msk [vmem:[#allocation2 + $0x8] sm:$0xff] %vm41, %v227
    // Predicated region
    $region26: #{tpu_custom_call.1} parent=1 // pred_check
      %p230 = pneg %p21
    $region27: #{tpu_custom_call.1} parent=1 // pred_check_branch
      %232 = sbr.rel (%p230) target = $region29
    $region28: #{tpu_custom_call.1} parent=1 // pred_region
      %v233 = vld [vmem:[#allocation2] sm:$0xff]
      %v234 = vld [vmem:[#allocation2 + $0x8] sm:$0xff]
      %v235 = vld [vmem:[%s4] sm:$0x1]
      %v237 = vlaneseq
      %v238 = vshrl.u32 %v237, 7
      %v239 = vsub.s32 0, %v238
      %v240 = vrot.slane %v235, %v239
      %v242 = vadd.f32 %v233, %v240
      %v243 = vadd.f32 %v234, %v240
      %244 = vst.msk [vmem:[#allocation2] sm:$0xff] %vm41, %v242
      %245 = vst.msk [vmem:[#allocation2 + $0x8] sm:$0xff] %vm41, %v243
    $region29: #{tpu_custom_call.1} parent=1 // pred_fallthru
      _
    // Predicated region
    $region30: #{tpu_custom_call.1} parent=1 // pred_check
      _
    $region31: #{tpu_custom_call.1} parent=1 // pred_check_branch
      %247 = sbr.rel (0) target = $region33
    $region32: #{tpu_custom_call.1} parent=1 // pred_region
      %s249 = ssub.s32 256, 256
      %250 = vsyncadd [#allocation3], %s249
      %s251 = sshll.u32 [#allocation2], 4
      %s252 = int_to_ptr.vmem [resolvable:$true] %s251
      %257 = dma.vmem_to_hbm [thread:$0]  %s252, 256, %s5, [#allocation3], 128, 128, 8
    $region33: #{tpu_custom_call.1} parent=1 // pred_fallthru
      _
    // Predicated region
    $region34: #{tpu_custom_call.1} parent=1 // pred_check
      _
    $region35: #{tpu_custom_call.1} parent=1 // pred_check_branch
      %259 = sbr.rel (0) target = $region37
    $region36: #{tpu_custom_call.1} parent=1 // pred_region
      %260 = dma.done [#allocation3], 256
    $region37: #{tpu_custom_call.1} parent=1 // pred_fallthru
      _
    %261 = vsyncpa [#allocation3], 1

</llo_original>
